<compile_context>
chip_gen: v7x
topology: tpu7x:2x2x1
jax: 0.10.0
libtpu: 0.0.40
codegen_flags: <defaults>
</compile_context>

<pallas_src>
import jax
import jax.numpy as jnp
from jax import lax
from jax.experimental import pallas as pl
from jax.experimental.pallas import tpu as pltpu


# ---------------------------------------------------------------------------
# Kernels
# ---------------------------------------------------------------------------
def _quantize_eval_kernel(x_ref, o_ref):
    # Hard round-to-nearest-even (same semantics as torch.round).
    o_ref[...] = jnp.round(x_ref[...]).astype(o_ref.dtype)


def _quantize_train_kernel(seed_ref, x_ref, o_ref):
    # Training-mode quantization noise: x + U(-0.5, 0.5).
    # Noise derived from a per-element counter hashed with a murmur3-style
    # finalizer; pure VPU ops, no extra HBM reads, fully deterministic.
    rows, cols = x_ref.shape
    r = lax.broadcasted_iota(jnp.int32, (rows, cols), 0)
    c = lax.broadcasted_iota(jnp.int32, (rows, cols), 1)
    # Globally unique element index across the whole grid (mod 2^32 is fine
    # for hashing purposes).
    idx = (pl.program_id(0) * rows + r) * cols + c

    # Mix the user seed in non-linearly (odd-constant multiply).
    seed_mix = seed_ref[0].astype(jnp.uint32) * jnp.uint32(0x9E3779B9)
    h = idx.astype(jnp.uint32) ^ seed_mix
    # murmur3 fmix32 finalizer.
    h = (h ^ (h >> jnp.uint32(16))) * jnp.uint32(0x85EBCA6B)
    h = (h ^ (h >> jnp.uint32(13))) * jnp.uint32(0xC2B2AE35)
    h = h ^ (h >> jnp.uint32(16))

    # Mantissa bit-trick: top 23 random bits -> float in [1, 2), shift to
    # [-0.5, 0.5).  Avoids an int->float convert + multiply chain.
    fbits = (h >> jnp.uint32(9)) | jnp.uint32(0x3F800000)
    noise = lax.bitcast_convert_type(fbits, jnp.float32) - jnp.float32(1.5)

    o_ref[...] = (x_ref[...].astype(jnp.float32) + noise).astype(o_ref.dtype)


# ---------------------------------------------------------------------------
# Layout / tiling helpers
# ---------------------------------------------------------------------------
_TARGET_TILE_BYTES = 2 * 1024 * 1024  # 2 MiB tile; double-buffered in+out = 8 MiB


def _choose_slab(total, itemsize):
    """Pick a lane-dense (rows, cols) slab; avoid padding when possible."""
    sublane = 32 // itemsize  # 8 for f32, 16 for bf16, 32 for int8/fp8
    for cols in (8192, 4096, 2048, 1024, 512, 256, 128):
        if total % (cols * sublane) == 0:
            return total // cols, cols, sublane, 0
    # Ragged remainder: pad to a (sublane, 1024)-aligned slab (one pad+slice).
    cols = 1024
    rows = -(-total // cols)
    rows = -(-rows // sublane) * sublane
    return rows, cols, sublane, rows * cols - total


def _choose_block_rows(rows, cols, itemsize, sublane):
    max_rows = max(sublane, _TARGET_TILE_BYTES // (cols * itemsize))
    if rows <= max_rows:
        return rows  # single block: no pipeline overhead for small tensors
    for cand in (4096, 2048, 1024, 512, 256, 128, 64, 32, 16, 8):
        if cand % sublane == 0 and cand <= max_rows and rows % cand == 0:
            return cand
    return sublane  # always divides rows by construction


# ---------------------------------------------------------------------------
# Wrapper
# ---------------------------------------------------------------------------
def quantize(x, training: bool = False, seed: int = 0, donate_input: bool = False):
    """Pallas equivalent of Quantization.forward(x)."""
    orig_shape = x.shape
    orig_dtype = x.dtype
    total = x.size
    itemsize = jnp.dtype(orig_dtype).itemsize

    rows, cols, sublane, pad = _choose_slab(total, itemsize)
    block_rows = _choose_block_rows(rows, cols, itemsize, sublane)
    grid = (rows // block_rows,)

    flat = x.reshape(-1)
    if pad:
        flat = jnp.pad(flat, (0, pad))
    x2 = flat.reshape(rows, cols)

    compiler_params = pltpu.CompilerParams(dimension_semantics=("parallel",))

    if not training:
        out2 = pl.pallas_call(
            _quantize_eval_kernel,
            out_shape=jax.ShapeDtypeStruct((rows, cols), orig_dtype),
            grid_spec=pltpu.PrefetchScalarGridSpec(
                num_scalar_prefetch=0,
                grid=grid,
                in_specs=[pl.BlockSpec((block_rows, cols), lambda i: (i, 0))],
                out_specs=pl.BlockSpec((block_rows, cols), lambda i: (i, 0)),
            ),
            compiler_params=compiler_params,
            input_output_aliases=({0: 0} if donate_input else {}),
        )(x2)
    else:
        seed_arr = jnp.asarray([seed], dtype=jnp.int32)
        out2 = pl.pallas_call(
            _quantize_train_kernel,
            out_shape=jax.ShapeDtypeStruct((rows, cols), orig_dtype),
            grid_spec=pltpu.PrefetchScalarGridSpec(
                num_scalar_prefetch=1,
                grid=grid,
                in_specs=[pl.BlockSpec((block_rows, cols), lambda i, s: (i, 0))],
                out_specs=pl.BlockSpec((block_rows, cols), lambda i, s: (i, 0)),
            ),
            compiler_params=compiler_params,
            input_output_aliases=({1: 0} if donate_input else {}),
        )(seed_arr, x2)

    if pad:
        return out2.reshape(-1)[:total].reshape(orig_shape)
    return out2.reshape(orig_shape)


# ---------------------------------------------------------------------------
# Demo / correctness check
# ---------------------------------------------------------------------------
if __name__ == "__main__":
    key = jax.random.PRNGKey(0)
    x = jax.random.normal(key, (2, 4, 16, 16), dtype=jnp.float32) * 4.0

    # Eval-mode (deterministic) path: y = round(x)
    y_eval = jax.block_until_ready(quantize(x, training=False))
    ref = jnp.round(x)
    assert y_eval.shape == x.shape and y_eval.dtype == x.dtype
    assert jnp.allclose(y_eval, ref), "eval-mode quantization mismatch"

    # Training-mode path: y = x + U(-0.5, 0.5); check bounded, non-degenerate noise.
    y_train = jax.block_until_ready(quantize(x, training=True, seed=42))
    noise = y_train - x
    assert y_train.shape == x.shape and y_train.dtype == x.dtype
    assert bool(jnp.all(jnp.abs(noise) <= 0.5 + 1e-6)), "training noise out of range"
    assert float(jnp.std(noise)) > 0.15, "training noise degenerate"

    print("KERNEL_OK")
</pallas_src>

<mosaic_0001>
module attributes {stable_mosaic.version = 11 : i64} {
  func.func @_quantize_eval_kernel(%arg0: i32, %arg1: memref<8x256xf32, #tpu.memory_space<vmem>>, %arg2: memref<8x256xf32, #tpu.memory_space<vmem>>) attributes {dimension_semantics = [#tpu.dimension_semantics<parallel>], iteration_bounds = array<i64: 1>, scalar_prefetch = 0 : i64, scratch_operands = 0 : i64, tpu.core_type = #tpu.core_type<tc>, window_params = [{transform_indices = @transform_0, window_bounds = array<i64: 8, 256>}, {transform_indices = @transform_1, window_bounds = array<i64: 8, 256>}]} {
    %c0 = arith.constant 0 : index
    %c0_0 = arith.constant 0 : index
    %0 = vector.load %arg1[%c0, %c0_0] : memref<8x256xf32, #tpu.memory_space<vmem>>, vector<8x256xf32>
    %1 = math.roundeven %0 : vector<8x256xf32>
    %c0_1 = arith.constant 0 : index
    %c0_2 = arith.constant 0 : index
    %2 = vector.load %arg2[%c0_1, %c0_2] : memref<8x256xf32, #tpu.memory_space<vmem>>, vector<8x256xf32>
    tpu.vector_store %arg2[%c0_1, %c0_2], %1 {strides = array<i32>} : memref<8x256xf32, #tpu.memory_space<vmem>>, vector<8x256xf32>,
    return
  }
  func.func @transform_0(%arg0: i32) -> (i32, i32) {
    %c0_i32 = arith.constant 0 : i32
    %c0_i32_0 = arith.constant 0 : i32
    return %arg0, %c0_i32 : i32, i32
  }
  func.func @transform_1(%arg0: i32) -> (i32, i32) {
    %c0_i32 = arith.constant 0 : i32
    %c0_i32_0 = arith.constant 0 : i32
    return %arg0, %c0_i32 : i32, i32
  }
}

</mosaic_0001>

<llo_original>
// kernel: tpu_custom_call.1
$region0: #{tpu_custom_call.1}
  #allocation0 [shape = 'u32[]', space=smem, size = 0x4, offset = 0x4, fixed_abs, tag = 'smem constant byte address 0x4 - core index']
  #allocation1 [shape = 'u32[144,128]{1,0:T(1,128)}', space=vmem, size = 0x12000, scoped, tag = 'internal scratch']
  %s0 = inlined_call_operand.hbm [shape: f32[8,256], index: 0, kind: input, shape index: {}]
  %s1 = inlined_call_operand.hbm [shape: f32[8,256], index: 1, kind: output, shape index: {}]
  %s2 = sld [smem:[#allocation0]]
  $region18: #{tpu_custom_call.1} parent=0
    _
  %s4 = ssub.s32 1, %s2
  %s5 = scalar_select 0, %s4, %s2
  $region1: #{tpu_custom_call.1} parent=0
    #allocation2 [shape = 'u8[8192]{0}', space=vmem, size = 0x2000, scoped, tag = 'input window, operand 0, single buffered']
    #allocation3 [shape = 's32[1]{0}', space=sflag, size = 0x4, scoped, tag = 'scoped memory for tpu_custom_call.1']
    #allocation4 [shape = 's32[1]{0}', space=sflag, size = 0x4, scoped, tag = 'scoped memory for tpu_custom_call.1']
    #allocation5 [shape = 'u8[8192]{0}', space=vmem, size = 0x2000, scoped, tag = 'output window, operand 0, single buffered']
    %6 = vsyncpa [#allocation3], 0
    %7 = vsyncpa [#allocation4], 0
    // Predicated region
    $region2: #{tpu_custom_call.1} parent=1 // pred_check
      _
    $region3: #{tpu_custom_call.1} parent=1 // pred_check_branch
      %9 = sbr.rel (0) target = $region5
    $region4: #{tpu_custom_call.1} parent=1 // pred_region
      %s11 = ssub.s32 256, 256
      %12 = vsyncadd [#allocation3], %s11
      %s14 = sshll.u32 [#allocation2], 4
      %s15 = int_to_ptr.vmem [resolvable:$true] %s14
      %17 = dma.hbm_to_vmem [thread:$0]  %s0, 256, %s15, [#allocation3]
    $region5: #{tpu_custom_call.1} parent=1 // pred_fallthru
      _
    // Predicated region
    $region6: #{tpu_custom_call.1} parent=1 // pred_check
      _
    $region7: #{tpu_custom_call.1} parent=1 // pred_check_branch
      %19 = sbr.rel (0) target = $region9
    $region8: #{tpu_custom_call.1} parent=1 // pred_region
      %20 = dma.done [#allocation3], 256
    $region9: #{tpu_custom_call.1} parent=1 // pred_fallthru
      _
    %v21 = vld [vmem:[#allocation2] sm:$0xff]
    %v22 = vld [vmem:[#allocation2 + $0x8] sm:$0xff]
    %v23 = vround.ne.pseudo %v21
    %v24 = vround.ne.pseudo %v22
    %25 = vst [vmem:[#allocation5] sm:$0xff] %v23
    %26 = vst [vmem:[#allocation5 + $0x8] sm:$0xff] %v24
    // Predicated region
    $region10: #{tpu_custom_call.1} parent=1 // pred_check
      _
    $region11: #{tpu_custom_call.1} parent=1 // pred_check_branch
      %28 = sbr.rel (0) target = $region13
    $region12: #{tpu_custom_call.1} parent=1 // pred_region
      %s30 = ssub.s32 256, 256
      %31 = vsyncadd [#allocation4], %s30
      %s33 = sshll.u32 [#allocation5], 4
      %s34 = int_to_ptr.vmem [resolvable:$true] %s33
      %36 = dma.vmem_to_hbm [thread:$0]  %s34, 256, %s1, [#allocation4]
    $region13: #{tpu_custom_call.1} parent=1 // pred_fallthru
      _
    // Predicated region
    $region14: #{tpu_custom_call.1} parent=1 // pred_check
      _
    $region15: #{tpu_custom_call.1} parent=1 // pred_check_branch
      %38 = sbr.rel (0) target = $region17
    $region16: #{tpu_custom_call.1} parent=1 // pred_region
      %39 = dma.done [#allocation4], 256
    $region17: #{tpu_custom_call.1} parent=1 // pred_fallthru
      _
    %40 = vsyncpa [#allocation3], 1
    %41 = vsyncpa [#allocation4], 1

</llo_original>
